<compile_context>
chip_gen: v5e
topology: v5e:2x2
jax: 0.10.0
libtpu: 0.0.40
codegen_flags: <defaults>
</compile_context>

<pallas_src>
import jax
import jax.numpy as jnp
from jax.experimental import pallas as pl
from jax.experimental.pallas import tpu as pltpu

_MIB = 1024 * 1024


def _round_up(v, m):
    return ((v + m - 1) // m) * m


def _linear_kernel(x_ref, wt_ref, b_ref, o_ref):
    # x_ref : (TM, D)  streamed token tile, native dtype (f32 or bf16)
    # wt_ref: (D, L)   pre-transposed weight, resident (constant block index)
    # b_ref : (1, L)   bias, resident
    # o_ref : (TM, L)  unpadded output tile (masked vst hides under HBM slack)
    y = jnp.dot(x_ref[...], wt_ref[...], preferred_element_type=jnp.float32)
    o_ref[...] = (y + b_ref[...].astype(jnp.float32)).astype(o_ref.dtype)


def token_classification_head(x, weight, bias, *, tm=None,
                              vmem_budget_bytes=36 * _MIB):
    """y = x @ weight.T + bias.

    x: (B, S, D); weight: (L, D) [PyTorch nn.Linear layout]; bias: (L,).
    Returns (B, S, L) in x.dtype.
    """
    B, S, D = x.shape
    L, Dw = weight.shape
    assert Dw == D, f"weight shape {weight.shape} inconsistent with D={D}"
    assert bias.shape == (L,)
    M = B * S

    out_dtype = x.dtype
    x_item = jnp.dtype(x.dtype).itemsize
    w_item = jnp.dtype(weight.dtype).itemsize
    b_item = jnp.dtype(bias.dtype).itemsize
    o_item = jnp.dtype(out_dtype).itemsize

    # ---- Tile-size selection (VMEM-budget aware) ---------------------------
    # Resident operands: count 2 copies (Pallas double-buffers by default even
    # though their block index never changes); with L unpadded this is tiny.
    resident_bytes = 2 * (D * L * w_item + L * b_item)
    # Streaming bytes per output row: double-buffered x tile + output tile.
    per_row_bytes = 2 * D * x_item + 2 * L * o_item
    avail = max(vmem_budget_bytes - resident_bytes, 2 * _MIB)
    tm_fit = max(int(avail // per_row_bytes), 8)

    if M <= 8:
        TM = M                       # single block; block == full dim is legal
    else:
        if tm is not None:
            TM = min(int(tm), M)
        else:
            # >= 2 grid steps so both v7x TensorCores get work; cap at 2048
            # rows (no measured gain beyond; only burns VMEM).
            half_m = _round_up(-(-M // 2), 8)
            TM = min(tm_fit, 2048, half_m)
        TM = max(8, (TM // 8) * 8)   # sublane-aligned row tiles

    grid_m = pl.cdiv(M, TM)

    # Actual VMEM footprint of the pipeline; tell the compiler, with headroom,
    # capped well under v7x's 64 MiB per-TensorCore physical VMEM.
    footprint = 2 * TM * D * x_item + 2 * TM * L * o_item + resident_bytes
    vmem_limit = int(min(max(footprint + 12 * _MIB, 16 * _MIB), 48 * _MIB))

    # ---- Operand layout ----------------------------------------------------
    x2d = x.reshape(M, D)
    wt = weight.T                    # one-time (L, D) -> (D, L), outside kernel
    b2d = bias.reshape(1, L)

    cost = pl.CostEstimate(
        flops=2 * M * D * L,
        transcendentals=0,
        bytes_accessed=(M * D * x_item + D * L * w_item + L * b_item
                        + M * L * o_item),
    )

    out = pl.pallas_call(
        _linear_kernel,
        out_shape=jax.ShapeDtypeStruct((M, L), out_dtype),
        grid_spec=pltpu.PrefetchScalarGridSpec(
            num_scalar_prefetch=0,
            grid=(grid_m,),
            in_specs=[
                pl.BlockSpec((TM, D), lambda i: (i, 0)),   # streamed x tiles
                pl.BlockSpec((D, L), lambda i: (0, 0)),    # resident weight
                pl.BlockSpec((1, L), lambda i: (0, 0)),    # resident bias
            ],
            out_specs=pl.BlockSpec((TM, L), lambda i: (i, 0)),
        ),
        compiler_params=pltpu.CompilerParams(
            dimension_semantics=("parallel",),
            vmem_limit_bytes=vmem_limit,
        ),
        cost_estimate=cost,
    )(x2d, wt, b2d)

    # Partial final tile (M % TM != 0): padded x rows are undefined, but the
    # computation is row-independent and Pallas masks out-of-range output rows.
    return out.reshape(B, S, L)


if __name__ == "__main__":
    batch, seq, hidden, num_labels = 2, 8, 32, 8

    key = jax.random.PRNGKey(0)
    kx, kw, kb = jax.random.split(key, 3)

    x = jax.random.normal(kx, (batch, seq, hidden), dtype=jnp.float32)
    # Deterministic init matching nn.Linear default: U(-1/sqrt(in), 1/sqrt(in)).
    bound = 1.0 / (hidden ** 0.5)
    weight = jax.random.uniform(kw, (num_labels, hidden), dtype=jnp.float32,
                                minval=-bound, maxval=bound)
    bias = jax.random.uniform(kb, (num_labels,), dtype=jnp.float32,
                              minval=-bound, maxval=bound)

    # f32 path.
    y = jax.block_until_ready(token_classification_head(x, weight, bias))
    y_ref = x @ weight.T + bias
    assert y.shape == (batch, seq, num_labels)
    assert y.dtype == x.dtype
    assert jnp.allclose(y, y_ref, atol=1e-5, rtol=1e-5)

    # bf16 fast path (streams half the bytes; f32 MXU accumulation).
    xb, wb, bb = (v.astype(jnp.bfloat16) for v in (x, weight, bias))
    yb = jax.block_until_ready(token_classification_head(xb, wb, bb))
    yb_ref = (xb.astype(jnp.float32) @ wb.astype(jnp.float32).T
              + bb.astype(jnp.float32))
    assert yb.shape == (batch, seq, num_labels)
    assert yb.dtype == jnp.bfloat16
    assert jnp.allclose(yb.astype(jnp.float32), yb_ref, atol=2e-2, rtol=2e-2)

    print("KERNEL_OK")
</pallas_src>

<mosaic_0001>
module attributes {stable_mosaic.version = 11 : i64} {
  func.func @_linear_kernel(%arg0: i32, %arg1: memref<8x32xf32, #tpu.memory_space<vmem>>, %arg2: memref<32x8xf32, #tpu.memory_space<vmem>>, %arg3: memref<1x8xf32, #tpu.memory_space<vmem>>, %arg4: memref<8x8xf32, #tpu.memory_space<vmem>>) attributes {dimension_semantics = [#tpu.dimension_semantics<parallel>], iteration_bounds = array<i64: 2>, scalar_prefetch = 0 : i64, scratch_operands = 0 : i64, tpu.core_type = #tpu.core_type<tc>, window_params = [{transform_indices = @transform_0, window_bounds = array<i64: 8, 32>}, {pipeline_mode = #tpu.pipeline_mode<synchronous>, transform_indices = @transform_1, window_bounds = array<i64: 32, 8>}, {pipeline_mode = #tpu.pipeline_mode<synchronous>, transform_indices = @transform_2, window_bounds = array<i64: 1, 8>}, {transform_indices = @transform_3, window_bounds = array<i64: 8, 8>}]} {
    %c0 = arith.constant 0 : index
    %c0_0 = arith.constant 0 : index
    %0 = vector.load %arg1[%c0, %c0_0] : memref<8x32xf32, #tpu.memory_space<vmem>>, vector<8x32xf32>
    %c0_1 = arith.constant 0 : index
    %c0_2 = arith.constant 0 : index
    %1 = vector.load %arg2[%c0_1, %c0_2] : memref<32x8xf32, #tpu.memory_space<vmem>>, vector<32x8xf32>
    %cst = arith.constant dense<0.000000e+00> : vector<8x8xf32>
    %2 = tpu.matmul %0, %1, %cst {dimension_numbers = #tpu.dot_dimension_numbers<[1], [0], [0], [1], [0, 0, 1, 1], [], []>} : vector<8x32xf32>, vector<32x8xf32>, vector<8x8xf32> -> vector<8x8xf32>
    %c0_3 = arith.constant 0 : index
    %c0_4 = arith.constant 0 : index
    %3 = vector.load %arg3[%c0_3, %c0_4] : memref<1x8xf32, #tpu.memory_space<vmem>>, vector<1x8xf32>
    %4 = vector.broadcast %3 : vector<1x8xf32> to vector<8x8xf32>
    %5 = arith.addf %2, %4 : vector<8x8xf32>
    %c0_5 = arith.constant 0 : index
    %c0_6 = arith.constant 0 : index
    %6 = vector.load %arg4[%c0_5, %c0_6] : memref<8x8xf32, #tpu.memory_space<vmem>>, vector<8x8xf32>
    tpu.vector_store %arg4[%c0_5, %c0_6], %5 {strides = array<i32>} : memref<8x8xf32, #tpu.memory_space<vmem>>, vector<8x8xf32>,
    return
  }
  func.func @transform_0(%arg0: i32) -> (i32, i32) {
    %c0_i32 = arith.constant 0 : i32
    %c0_i32_0 = arith.constant 0 : i32
    return %arg0, %c0_i32 : i32, i32
  }
  func.func @transform_1(%arg0: i32) -> (i32, i32) {
    %c0_i32 = arith.constant 0 : i32
    %c0_i32_0 = arith.constant 0 : i32
    %c0_i32_1 = arith.constant 0 : i32
    return %c0_i32, %c0_i32_0 : i32, i32
  }
  func.func @transform_2(%arg0: i32) -> (i32, i32) {
    %c0_i32 = arith.constant 0 : i32
    %c0_i32_0 = arith.constant 0 : i32
    %c0_i32_1 = arith.constant 0 : i32
    return %c0_i32, %c0_i32_0 : i32, i32
  }
  func.func @transform_3(%arg0: i32) -> (i32, i32) {
    %c0_i32 = arith.constant 0 : i32
    %c0_i32_0 = arith.constant 0 : i32
    return %arg0, %c0_i32 : i32, i32
  }
}

</mosaic_0001>

<llo_original>
// kernel: tpu_custom_call.1
$region0: #{tpu_custom_call.1}
  #allocation0 [shape = 'u32[]', space=smem, size = 0x4, offset = 0x4, fixed_abs, tag = 'smem constant byte address 0x4 - core index']
  #allocation1 [shape = 'u32[72,128]{1,0:T(1,128)}', space=vmem, size = 0x9000, scoped, tag = 'internal scratch']
  %s0 = inlined_call_operand.vmem [shape: f32[16,32], index: 0, kind: input, shape index: {}]
  %s1 = inlined_call_operand.vmem [shape: f32[32,8], index: 1, kind: input, shape index: {}]
  %s2 = inlined_call_operand.vmem [shape: f32[1,8], index: 2, kind: input, shape index: {}]
  %s3 = inlined_call_operand.vmem [shape: f32[16,8], index: 3, kind: output, shape index: {}]
  %s4 = sld [smem:[#allocation0]]
  $region45: #{tpu_custom_call.1} parent=0
    _
  %s6 = ssub.s32 1, %s4
  %s7 = scalar_select 0, %s6, %s4
  loop: start=0, step=1, limit=4
  $region2: #{tpu_custom_call.1} parent=0 // loop_pre_header
    _
  $region3: #{tpu_custom_call.1} parent=0 // loop_header
    %s9 = sphi 0, %s13
    %p10 = scmp.ge.s32.totalorder %s9, 4
    %s19 = sphi 0, %s21
    %s22 = sphi 0, %s19
    %s23 = sphi 0, %s22
    %s39 = sphi 0, %s23
    %s43 = sphi 0, %s43
    %s45 = sphi 0, %s43
    %s46 = sphi 0, %s45
    %s60 = sphi 0, %s46
    %s64 = sphi 0, %s64
    %s66 = sphi 0, %s64
    %s67 = sphi 0, %s66
    %s81 = sphi 0, %s67
    %s87 = sphi 0, %s89
    %s90 = sphi 0, %s87
    %s91 = sphi 0, %s90
    %s107 = sphi 0, %s91
  $region4: #{tpu_custom_call.1} parent=0 // loop_header_branch
    %12 = sbr.rel (%p10) target = $region8
  $region5: #{tpu_custom_call.1} parent=0 // loop_body
    %s14 = ssub.s32 %s9, 1
    %s15 = ssub.s32 %s9, 2
    %s16 = sadd.s32 %s9, 1
    %s17 = ssub.s32 %s9, %s16
    %p18 = scmp.eq.s32.totalorder %s17, 0
    %s20 = sadd.s32 %s19, 1
    %s21 = scalar_select %p18, %s19, %s20
    %p24 = pneg %p18
    %p25 = scmp.eq.s32.totalorder %s9, 1
    %p26 = por %p24, %p25
    %p27 = scmp.ne.s32.totalorder %s19, %s22
    %p28 = scmp.eq.s32.totalorder %s9, 0
    %p29 = por %p27, %p28
    %p30 = scmp.ne.s32.totalorder %s19, %s22
    %p31 = scmp.eq.s32.totalorder %s14, 1
    %p32 = por %p30, %p31
    %p33 = scmp.ne.s32.totalorder %s22, %s23
    %p34 = scmp.eq.s32.totalorder %s14, 0
    %p35 = por %p33, %p34
    %p36 = scmp.ne.s32.totalorder %s22, %s23
    %p37 = scmp.eq.s32.totalorder %s15, 1
    %p38 = por %p36, %p37
    %p40 = scmp.ne.s32.totalorder %s23, %s39
    %p41 = scmp.eq.s32.totalorder %s15, 0
    %p42 = por %p40, %p41
    %s44 = sadd.s32 %s43, 1
    %p47 = scmp.eq.s32.totalorder %s9, 1
    %p48 = scmp.ne.s32.totalorder %s43, %s45
    %p49 = scmp.eq.s32.totalorder %s9, 0
    %p50 = por %p48, %p49
    %p51 = scmp.ne.s32.totalorder %s43, %s45
    %p52 = scmp.eq.s32.totalorder %s14, 1
    %p53 = por %p51, %p52
    %p54 = scmp.ne.s32.totalorder %s45, %s46
    %p55 = scmp.eq.s32.totalorder %s14, 0
    %p56 = por %p54, %p55
    %p57 = scmp.ne.s32.totalorder %s45, %s46
    %p58 = scmp.eq.s32.totalorder %s15, 1
    %p59 = por %p57, %p58
    %p61 = scmp.ne.s32.totalorder %s46, %s60
    %p62 = scmp.eq.s32.totalorder %s15, 0
    %p63 = por %p61, %p62
    %s65 = sadd.s32 %s64, 1
    %p68 = scmp.eq.s32.totalorder %s9, 1
    %p69 = scmp.ne.s32.totalorder %s64, %s66
    %p70 = scmp.eq.s32.totalorder %s9, 0
    %p71 = por %p69, %p70
    %p72 = scmp.ne.s32.totalorder %s64, %s66
    %p73 = scmp.eq.s32.totalorder %s14, 1
    %p74 = por %p72, %p73
    %p75 = scmp.ne.s32.totalorder %s66, %s67
    %p76 = scmp.eq.s32.totalorder %s14, 0
    %p77 = por %p75, %p76
    %p78 = scmp.ne.s32.totalorder %s66, %s67
    %p79 = scmp.eq.s32.totalorder %s15, 1
    %p80 = por %p78, %p79
    %p82 = scmp.ne.s32.totalorder %s67, %s81
    %p83 = scmp.eq.s32.totalorder %s15, 0
    %p84 = por %p82, %p83
    %s85 = ssub.s32 %s9, %s16
    %p86 = scmp.eq.s32.totalorder %s85, 0
    %s88 = sadd.s32 %s87, 1
    %s89 = scalar_select %p86, %s87, %s88
    %p92 = pneg %p86
    %p93 = scmp.eq.s32.totalorder %s9, 1
    %p94 = por %p92, %p93
    %p95 = scmp.ne.s32.totalorder %s87, %s90
    %p96 = scmp.eq.s32.totalorder %s9, 0
    %p97 = por %p95, %p96
    %p98 = scmp.ne.s32.totalorder %s87, %s90
    %p99 = scmp.eq.s32.totalorder %s14, 1
    %p100 = por %p98, %p99
    %p101 = scmp.ne.s32.totalorder %s90, %s91
    %p102 = scmp.eq.s32.totalorder %s14, 0
    %p103 = por %p101, %p102
    %p104 = scmp.ne.s32.totalorder %s90, %s91
    %p105 = scmp.eq.s32.totalorder %s15, 1
    %p106 = por %p104, %p105
    %p108 = scmp.ne.s32.totalorder %s91, %s107
    %p109 = scmp.eq.s32.totalorder %s15, 0
    %p110 = por %p108, %p109
    %p111 = scmp.le.s32.totalorder 1, %s9
    %p112 = scmp.lt.s32.totalorder %s9, 3
    %p113 = pnand %p111, %p112
    %p114 = pneg %p113
    // Predicated region
    $region9: #{tpu_custom_call.1} parent=5 // pred_check
      _
    $region10: #{tpu_custom_call.1} parent=5 // pred_check_branch
      %116 = sbr.rel (%p113) target = $region12
    $region11: #{tpu_custom_call.1} parent=5 // pred_region
      %s117 = ssub.s32 %s9, 1
      // Predicated region
      $region13: #{tpu_custom_call.1} parent=11 // pred_check
        %p118 = pneg %p56
      $region14: #{tpu_custom_call.1} parent=11 // pred_check_branch
        %120 = sbr.rel (%p118) target = $region16
      $region15: #{tpu_custom_call.1} parent=11 // pred_region
        _
      $region16: #{tpu_custom_call.1} parent=11 // pred_fallthru
        _
      // Predicated region
      $region17: #{tpu_custom_call.1} parent=11 // pred_check
        %p121 = pneg %p77
      $region18: #{tpu_custom_call.1} parent=11 // pred_check_branch
        %123 = sbr.rel (%p121) target = $region20
      $region19: #{tpu_custom_call.1} parent=11 // pred_region
        _
      $region20: #{tpu_custom_call.1} parent=11 // pred_fallthru
        _
    $region12: #{tpu_custom_call.1} parent=5 // pred_fallthru
      _
    %p124 = scmp.lt.s32.totalorder %s9, 2
    // Predicated region
    $region21: #{tpu_custom_call.1} parent=5 // pred_check
      %p125 = pneg %p124
    $region22: #{tpu_custom_call.1} parent=5 // pred_check_branch
      %127 = sbr.rel (%p125) target = $region24
    $region23: #{tpu_custom_call.1} parent=5 // pred_region
      // Predicated region
      $region25: #{tpu_custom_call.1} parent=23 // pred_check
        %p128 = pneg %p29
      $region26: #{tpu_custom_call.1} parent=23 // pred_check_branch
        %130 = sbr.rel (%p128) target = $region28
      $region27: #{tpu_custom_call.1} parent=23 // pred_region
        %p131 = scmp.lt.s32.totalorder %s9, 1
        %s132 = scalar_select %p131, %s9, 1
        %s133 = smul.addr %s132, 8
        %s134 = scalar_lea.vmem %s0, %s133
      $region28: #{tpu_custom_call.1} parent=23 // pred_fallthru
        _
    $region24: #{tpu_custom_call.1} parent=5 // pred_fallthru
      _
    %p135 = scmp.le.s32.totalorder 1, %s9
    %p136 = scmp.lt.s32.totalorder %s9, 3
    %p137 = pnand %p135, %p136
    %p138 = pneg %p137
    // Predicated region
    $region29: #{tpu_custom_call.1} parent=5 // pred_check
      _
    $region30: #{tpu_custom_call.1} parent=5 // pred_check_branch
      %140 = sbr.rel (%p137) target = $region32
    $region31: #{tpu_custom_call.1} parent=5 // pred_region
      %s141 = ssub.s32 %s9, 1
      %p142 = scmp.lt.s32.totalorder %s14, 1
      %s143 = scalar_select %p142, %s14, 1
      %s144 = smul.addr %s143, 8
      %s145 = scalar_lea.vmem %s0, %s144
      %p146 = pneg %p35
      %p147 = pneg %p32
      %p148 = pneg %p56
      %p149 = pneg %p53
      %p150 = pneg %p77
      %p151 = pneg %p74
      %p152 = pneg %p103
      %p153 = pneg %p100
      %p154 = scmp.lt.s32.totalorder %s14, 1
      %s155 = scalar_select %p154, %s14, 1
      %s156 = smul.addr %s155, 8
      %s157 = scalar_lea.vmem %s3, %s156
      %p158 = scmp.lt.s32.totalorder %s14, 1
      %s159 = scalar_select %p158, %s14, 1
      %s160 = smul.addr %s159, 8
      %s161 = scalar_lea.vmem %s0, %s160
      %p162 = scmp.lt.s32.totalorder %s14, 1
      %s163 = scalar_select %p162, %s14, 1
      %s164 = smul.addr %s163, 8
      %s165 = scalar_lea.vmem %s3, %s164
      %v166 = vld [vmem:[%s161] sm:$0xff]
      %v167 = vld [vmem:[%s1] sm:$0xff]
      %v168 = vld [vmem:[%s1 + $0x8] sm:$0xff]
      %v169 = vld [vmem:[%s1 + $0x10] sm:$0xff]
      %v170 = vld [vmem:[%s1 + $0x18] sm:$0xff]
      %v171 = vld [vmem:[%s2] sm:$0x1]
      %v173 = vperm.slane %v171, 0
      %vm175 = vcmask 261120
      %v177 = vsel %vm175, %v166, 0
      %179 = vmatpush.msra.mxu0 0.0
      %180 = vmatpush.msra.mxu0 0.0
      %181 = vmatpush.msra.mxu0 0.0
      %182 = vmatpush.msra.mxu0 0.0
      %183 = vmatpush.msra.mxu0 0.0
      %184 = vmatpush.msra.mxu0 0.0
      %185 = vmatpush.msra.mxu0 0.0
      %186 = vmatpush.msra.mxu0 0.0
      %187 = vmatpush.msra.mxu0 0.0
      %188 = vmatpush.msra.mxu0 0.0
      %189 = vmatpush.msra.mxu0 0.0
      %190 = vmatpush.msra.mxu0 0.0
      %191 = vmatpush.msra.mxu0 %v170
      %192 = vmatpush.msra.mxu0 %v169
      %193 = vmatpush.msra.mxu0 %v168
      %194 = vmatpush.msra.mxu0 %v167
      %195 = vmatmul.f32.gmra.mxu0 %v177
      %v196 = vpop.f32.mrf.mxu0
      %v197 = vadd.f32 %v173, %v196
      %198 = vdwg.mxu0
      %vm199 = vcmask 64512
      %200 = vst.msk [vmem:[%s165] sm:$0xff] %vm199, %v197
      %p201 = scmp.lt.s32.totalorder %s14, 1
      %s202 = scalar_select %p201, %s14, 1
      %s203 = smul.addr %s202, 8
      %s204 = scalar_lea.vmem %s3, %s203
      // Predicated region
      $region33: #{tpu_custom_call.1} parent=31 // pred_check
        %p205 = pneg %p100
      $region34: #{tpu_custom_call.1} parent=31 // pred_check_branch
        %207 = sbr.rel (%p205) target = $region36
      $region35: #{tpu_custom_call.1} parent=31 // pred_region
        _
      $region36: #{tpu_custom_call.1} parent=31 // pred_fallthru
        _
    $region32: #{tpu_custom_call.1} parent=5 // pred_fallthru
      _
    %p208 = scmp.le.s32.totalorder 2, %s9
    // Predicated region
    $region37: #{tpu_custom_call.1} parent=5 // pred_check
      %p209 = pneg %p208
    $region38: #{tpu_custom_call.1} parent=5 // pred_check_branch
      %211 = sbr.rel (%p209) target = $region40
    $region39: #{tpu_custom_call.1} parent=5 // pred_region
      %s212 = ssub.s32 %s9, 2
      // Predicated region
      $region41: #{tpu_custom_call.1} parent=39 // pred_check
        %p213 = pneg %p106
      $region42: #{tpu_custom_call.1} parent=39 // pred_check_branch
        %215 = sbr.rel (%p213) target = $region44
      $region43: #{tpu_custom_call.1} parent=39 // pred_region
        %p216 = scmp.lt.s32.totalorder %s15, 1
        %s217 = scalar_select %p216, %s15, 1
        %s218 = smul.addr %s217, 8
        %s219 = scalar_lea.vmem %s3, %s218
      $region44: #{tpu_custom_call.1} parent=39 // pred_fallthru
        _
    $region40: #{tpu_custom_call.1} parent=5 // pred_fallthru
      _
  $region6: #{tpu_custom_call.1} parent=0 // loop_footer
    %s13 = sadd.s32 1, %s9
  $region7: #{tpu_custom_call.1} parent=0 // loop_footer_branch
    %8 = sbr.rel target = $region3
  $region8: #{tpu_custom_call.1} parent=0 // loop_exit
    _

</llo_original>
